<compile_context>
chip_gen: v5e
topology: v5e:2x2
jax: 0.10.0
libtpu: 0.0.40
codegen_flags: <defaults>
</compile_context>

<pallas_src>
import functools

import jax
import jax.numpy as jnp
from jax import lax
from jax.experimental import pallas as pl
from jax.experimental.pallas import tpu as pltpu


def _linear_kernel(x_ref, w_ref, b_ref, o_ref):
    """One (tm, tn) output tile: full-K matmul + fused bias add.

    x_ref: (tm, K)   activation tile (resident across the j axis)
    w_ref: (tn, K)   weight tile in native PyTorch (out, in) layout
    b_ref: (1, tn)   bias tile
    o_ref: (tm, tn)  output tile
    """
    acc = lax.dot_general(
        x_ref[...],
        w_ref[...],
        dimension_numbers=(((1,), (1,)), ((), ())),  # contract K on both (x @ W^T)
        preferred_element_type=jnp.float32,
    )
    o_ref[...] = (acc + b_ref[...]).astype(o_ref.dtype)


@functools.partial(jax.jit, static_argnames=("tn", "tm_max"))
def linear_head(x, weight, bias, *, tn=256, tm_max=256):
    """out = x @ weight.T + bias  (F.linear semantics).

    x:      (M, K)  float32
    weight: (N, K)  float32   (PyTorch layout: out_features x in_features)
    bias:   (N,)    float32
    """
    M, K = x.shape
    N, K2 = weight.shape
    assert K == K2
    out_dtype = x.dtype

    # --- pad N (classes) up to a lane-aligned multiple of the N tile ---------
    n_lane = ((N + 127) // 128) * 128          # lane-align first
    tn_eff = min(tn, n_lane)                   # tn_eff is a multiple of 128
    n_pad = ((n_lane + tn_eff - 1) // tn_eff) * tn_eff
    if n_pad != N:
        weight = jnp.pad(weight, ((0, n_pad - N), (0, 0)))
        bias = jnp.pad(bias, ((0, n_pad - N),))
    b2d = bias.reshape(1, n_pad)

    # --- M (batch) tiling: keep x resident when small, tile when large -------
    tm = M if M <= tm_max else tm_max
    m_pad = ((M + tm - 1) // tm) * tm
    if m_pad != M:
        x = jnp.pad(x, ((0, m_pad - M), (0, 0)))

    grid = (m_pad // tm, n_pad // tn_eff)

    out = pl.pallas_call(
        _linear_kernel,
        out_shape=jax.ShapeDtypeStruct((m_pad, n_pad), out_dtype),
        grid_spec=pltpu.PrefetchScalarGridSpec(
            num_scalar_prefetch=0,
            grid=grid,
            in_specs=[
                pl.BlockSpec((tm, K), lambda i, j: (i, 0)),        # x strip (full K)
                pl.BlockSpec((tn_eff, K), lambda i, j: (j, 0)),    # W tile, native (N,K)
                pl.BlockSpec((1, tn_eff), lambda i, j: (0, j)),    # bias tile
            ],
            out_specs=pl.BlockSpec((tm, tn_eff), lambda i, j: (i, j)),
        ),
        compiler_params=pltpu.CompilerParams(
            dimension_semantics=("parallel", "parallel"),
        ),
    )(x, weight, b2d)

    if m_pad != M or n_pad != N:
        out = out[:M, :N]
    return out


def softmax_head_forward(x, label, weight, bias):
    """Mirror of Softmax.forward(input, label) with device_id=None."""
    del label  # unused in the reference forward (device_id=None path)
    return linear_head(x, weight, bias)


def xavier_uniform(key, out_features, in_features):
    # nn.init.xavier_uniform_ on a (out, in) matrix: bound = sqrt(6/(fan_in+fan_out))
    bound = (6.0 / (in_features + out_features)) ** 0.5
    return jax.random.uniform(
        key, (out_features, in_features), jnp.float32, minval=-bound, maxval=bound
    )


if __name__ == "__main__":
    key = jax.random.PRNGKey(0)

    # Case 1: realistic ViT-style head with non-128-multiple class count.
    batch, in_features, out_features = 8, 128, 1000
    k_x, k_w = jax.random.split(key)
    x = jax.random.normal(k_x, (batch, in_features), dtype=jnp.float32)
    label = jnp.zeros((batch,), dtype=jnp.int32)  # unused, matches forward signature
    weight = xavier_uniform(k_w, out_features, in_features)
    bias = jnp.zeros((out_features,), dtype=jnp.float32)

    out = softmax_head_forward(x, label, weight, bias)
    out = jax.block_until_ready(out)
    ref = x @ weight.T + bias
    assert out.shape == (batch, out_features)
    assert jnp.allclose(out, ref, atol=1e-4, rtol=1e-4)

    # Case 2: aligned shapes (no padding path).
    batch2, in2, out2 = 16, 128, 256
    k_x2, k_w2 = jax.random.split(k_w)
    x2 = jax.random.normal(k_x2, (batch2, in2), dtype=jnp.float32)
    w2 = xavier_uniform(k_w2, out2, in2)
    b2 = jax.random.normal(jax.random.PRNGKey(1), (out2,), dtype=jnp.float32)
    out_2 = jax.block_until_ready(softmax_head_forward(x2, None, w2, b2))
    ref2 = x2 @ w2.T + b2
    assert out_2.shape == (batch2, out2)
    assert jnp.allclose(out_2, ref2, atol=1e-4, rtol=1e-4)

    print("KERNEL_OK")
</pallas_src>

<mosaic_0001>
module attributes {stable_mosaic.version = 11 : i64} {
  func.func @_linear_kernel(%arg0: i32, %arg1: i32, %arg2: memref<8x128xf32, #tpu.memory_space<vmem>>, %arg3: memref<256x128xf32, #tpu.memory_space<vmem>>, %arg4: memref<1x256xf32, #tpu.memory_space<vmem>>, %arg5: memref<8x256xf32, #tpu.memory_space<vmem>>) attributes {dimension_semantics = [#tpu.dimension_semantics<parallel>, #tpu.dimension_semantics<parallel>], iteration_bounds = array<i64: 1, 4>, scalar_prefetch = 0 : i64, scratch_operands = 0 : i64, tpu.core_type = #tpu.core_type<tc>, window_params = [{transform_indices = @transform_0, window_bounds = array<i64: 8, 128>}, {transform_indices = @transform_1, window_bounds = array<i64: 256, 128>}, {transform_indices = @transform_2, window_bounds = array<i64: 1, 256>}, {transform_indices = @transform_3, window_bounds = array<i64: 8, 256>}]} {
    %c0 = arith.constant 0 : index
    %c0_0 = arith.constant 0 : index
    %0 = vector.load %arg2[%c0, %c0_0] : memref<8x128xf32, #tpu.memory_space<vmem>>, vector<8x128xf32>
    %c0_1 = arith.constant 0 : index
    %c0_2 = arith.constant 0 : index
    %1 = vector.load %arg3[%c0_1, %c0_2] : memref<256x128xf32, #tpu.memory_space<vmem>>, vector<256x128xf32>
    %cst = arith.constant dense<0.000000e+00> : vector<8x256xf32>
    %2 = tpu.matmul %0, %1, %cst {dimension_numbers = #tpu.dot_dimension_numbers<[1], [1], [0], [0], [0, 0, 1, 0], [], []>} : vector<8x128xf32>, vector<256x128xf32>, vector<8x256xf32> -> vector<8x256xf32>
    %c0_3 = arith.constant 0 : index
    %c0_4 = arith.constant 0 : index
    %3 = vector.load %arg4[%c0_3, %c0_4] : memref<1x256xf32, #tpu.memory_space<vmem>>, vector<1x256xf32>
    %4 = vector.broadcast %3 : vector<1x256xf32> to vector<8x256xf32>
    %5 = arith.addf %2, %4 : vector<8x256xf32>
    %c0_5 = arith.constant 0 : index
    %c0_6 = arith.constant 0 : index
    %6 = vector.load %arg5[%c0_5, %c0_6] : memref<8x256xf32, #tpu.memory_space<vmem>>, vector<8x256xf32>
    tpu.vector_store %arg5[%c0_5, %c0_6], %5 {strides = array<i32>} : memref<8x256xf32, #tpu.memory_space<vmem>>, vector<8x256xf32>,
    return
  }
  func.func @transform_0(%arg0: i32, %arg1: i32) -> (i32, i32) {
    %c0_i32 = arith.constant 0 : i32
    %c0_i32_0 = arith.constant 0 : i32
    return %arg0, %c0_i32 : i32, i32
  }
  func.func @transform_1(%arg0: i32, %arg1: i32) -> (i32, i32) {
    %c0_i32 = arith.constant 0 : i32
    %c0_i32_0 = arith.constant 0 : i32
    return %arg1, %c0_i32 : i32, i32
  }
  func.func @transform_2(%arg0: i32, %arg1: i32) -> (i32, i32) {
    %c0_i32 = arith.constant 0 : i32
    %c0_i32_0 = arith.constant 0 : i32
    return %c0_i32, %arg1 : i32, i32
  }
  func.func @transform_3(%arg0: i32, %arg1: i32) -> (i32, i32) {
    %c0_i32 = arith.constant 0 : i32
    return %arg0, %arg1 : i32, i32
  }
}

</mosaic_0001>

<llo_original>
// kernel: linear_head.1
$region0: #{linear_head.1}
  #allocation0 [shape = 'u32[]', space=smem, size = 0x4, offset = 0x4, fixed_abs, tag = 'smem constant byte address 0x4 - core index']
  #allocation1 [shape = 'u32[72,128]{1,0:T(1,128)}', space=vmem, size = 0x9000, scoped, tag = 'internal scratch']
  %s0 = inlined_call_operand.vmem [shape: f32[8,128], index: 0, kind: input, shape index: {}]
  %s1 = inlined_call_operand.vmem [shape: f32[1024,128], index: 1, kind: input, shape index: {}]
  %s2 = inlined_call_operand.vmem [shape: f32[1,1024], index: 2, kind: input, shape index: {}]
  %s3 = inlined_call_operand.hbm [shape: f32[8,1024], index: 3, kind: output, shape index: {}]
  %s4 = sld [smem:[#allocation0]]
  $region45: #{linear_head.1} parent=0
    _
  %s6 = ssub.s32 1, %s4
  %s7 = scalar_select 0, %s6, %s4
  $region1: #{linear_head.1} parent=0
    #allocation2 [shape = 'u8[16384]{0}', space=vmem, size = 0x4000, scoped, tag = 'output window, operand 0']
    #allocation3 [shape = 's32[2]{0}', space=sflag, size = 0x8, scoped, tag = 'scoped memory for linear_head.1']
    %8 = vsyncpa [#allocation3], 0
    %s9 = scalar_lea.sflag [#allocation3], 1
    %10 = vsyncpa %s9, 0
    loop: start=0, step=1, limit=6
    $region2: #{linear_head.1} parent=1 // loop_pre_header
      _
    $region3: #{linear_head.1} parent=1 // loop_header
      %s12 = sphi 0, %s16
      %p13 = scmp.ge.s32.totalorder %s12, 6
      %s19 = sphi 0, %s31
      %s20 = sphi 0, %s27
      %s21 = sphi 0, %s19
      %s22 = sphi 0, %s20
      %s23 = sphi 0, %s21
      %s24 = sphi 0, %s22
      %s34 = sphi 0, %s36
      %s37 = sphi 0, %s34
      %s38 = sphi 0, %s37
      %s54 = sphi 0, %s38
      %s60 = sphi 0, %s62
      %s63 = sphi 0, %s60
      %s64 = sphi 0, %s63
      %s80 = sphi 0, %s64
      %s86 = sphi 0, %s88
      %s89 = sphi 0, %s86
      %s90 = sphi 0, %s89
      %s106 = sphi 0, %s90
      %s114 = sphi 0, %s116
      %s117 = sphi 0, %s114
      %s118 = sphi 0, %s117
      %s134 = sphi 0, %s118
    $region4: #{linear_head.1} parent=1 // loop_header_branch
      %15 = sbr.rel (%p13) target = $region8
    $region5: #{linear_head.1} parent=1 // loop_body
      %s17 = ssub.s32 %s12, 1
      %s18 = ssub.s32 %s12, 2
      %s25 = sadd.s32 1, %s20
      %p26 = scmp.ge.s32.totalorder %s25, 4
      %s27 = scalar_select %p26, 0, %s25
      %s28 = sadd.s32 1, %s19
      %s29 = scalar_select %p26, %s28, %s19
      %p30 = scmp.ge.s32.totalorder %s29, 1
      %s31 = scalar_select %p30, 0, %s29
      %s32 = ssub.s32 %s19, %s31
      %p33 = scmp.eq.s32.totalorder %s32, 0
      %s35 = sadd.s32 %s34, 1
      %s36 = scalar_select %p33, %s34, %s35
      %p39 = pneg %p33
      %p40 = scmp.eq.s32.totalorder %s12, 3
      %p41 = por %p39, %p40
      %p42 = scmp.ne.s32.totalorder %s34, %s37
      %p43 = scmp.eq.s32.totalorder %s12, 0
      %p44 = por %p42, %p43
      %p45 = scmp.ne.s32.totalorder %s34, %s37
      %p46 = scmp.eq.s32.totalorder %s17, 3
      %p47 = por %p45, %p46
      %p48 = scmp.ne.s32.totalorder %s37, %s38
      %p49 = scmp.eq.s32.totalorder %s17, 0
      %p50 = por %p48, %p49
      %p51 = scmp.ne.s32.totalorder %s37, %s38
      %p52 = scmp.eq.s32.totalorder %s18, 3
      %p53 = por %p51, %p52
      %p55 = scmp.ne.s32.totalorder %s38, %s54
      %p56 = scmp.eq.s32.totalorder %s18, 0
      %p57 = por %p55, %p56
      %s58 = ssub.s32 %s20, %s27
      %p59 = scmp.eq.s32.totalorder %s58, 0
      %s61 = sadd.s32 %s60, 1
      %s62 = scalar_select %p59, %s60, %s61
      %p65 = pneg %p59
      %p66 = scmp.eq.s32.totalorder %s12, 3
      %p67 = por %p65, %p66
      %p68 = scmp.ne.s32.totalorder %s60, %s63
      %p69 = scmp.eq.s32.totalorder %s12, 0
      %p70 = por %p68, %p69
      %p71 = scmp.ne.s32.totalorder %s60, %s63
      %p72 = scmp.eq.s32.totalorder %s17, 3
      %p73 = por %p71, %p72
      %p74 = scmp.ne.s32.totalorder %s63, %s64
      %p75 = scmp.eq.s32.totalorder %s17, 0
      %p76 = por %p74, %p75
      %p77 = scmp.ne.s32.totalorder %s63, %s64
      %p78 = scmp.eq.s32.totalorder %s18, 3
      %p79 = por %p77, %p78
      %p81 = scmp.ne.s32.totalorder %s64, %s80
      %p82 = scmp.eq.s32.totalorder %s18, 0
      %p83 = por %p81, %p82
      %s84 = ssub.s32 %s20, %s27
      %p85 = scmp.eq.s32.totalorder %s84, 0
      %s87 = sadd.s32 %s86, 1
      %s88 = scalar_select %p85, %s86, %s87
      %p91 = pneg %p85
      %p92 = scmp.eq.s32.totalorder %s12, 3
      %p93 = por %p91, %p92
      %p94 = scmp.ne.s32.totalorder %s86, %s89
      %p95 = scmp.eq.s32.totalorder %s12, 0
      %p96 = por %p94, %p95
      %p97 = scmp.ne.s32.totalorder %s86, %s89
      %p98 = scmp.eq.s32.totalorder %s17, 3
      %p99 = por %p97, %p98
      %p100 = scmp.ne.s32.totalorder %s89, %s90
      %p101 = scmp.eq.s32.totalorder %s17, 0
      %p102 = por %p100, %p101
      %p103 = scmp.ne.s32.totalorder %s89, %s90
      %p104 = scmp.eq.s32.totalorder %s18, 3
      %p105 = por %p103, %p104
      %p107 = scmp.ne.s32.totalorder %s90, %s106
      %p108 = scmp.eq.s32.totalorder %s18, 0
      %p109 = por %p107, %p108
      %s110 = ssub.s32 %s19, %s31
      %s111 = ssub.s32 %s20, %s27
      %s112 = sor.u32 %s110, %s111
      %p113 = scmp.eq.s32.totalorder %s112, 0
      %s115 = sadd.s32 %s114, 1
      %s116 = scalar_select %p113, %s114, %s115
      %p119 = pneg %p113
      %p120 = scmp.eq.s32.totalorder %s12, 3
      %p121 = por %p119, %p120
      %p122 = scmp.ne.s32.totalorder %s114, %s117
      %p123 = scmp.eq.s32.totalorder %s12, 0
      %p124 = por %p122, %p123
      %p125 = scmp.ne.s32.totalorder %s114, %s117
      %p126 = scmp.eq.s32.totalorder %s17, 3
      %p127 = por %p125, %p126
      %p128 = scmp.ne.s32.totalorder %s117, %s118
      %p129 = scmp.eq.s32.totalorder %s17, 0
      %p130 = por %p128, %p129
      %p131 = scmp.ne.s32.totalorder %s117, %s118
      %p132 = scmp.eq.s32.totalorder %s18, 3
      %p133 = por %p131, %p132
      %p135 = scmp.ne.s32.totalorder %s118, %s134
      %p136 = scmp.eq.s32.totalorder %s18, 0
      %p137 = por %p135, %p136
      %p138 = scmp.le.s32.totalorder 1, %s12
      %p139 = scmp.lt.s32.totalorder %s12, 5
      %p140 = pnand %p138, %p139
      %p141 = pneg %p140
      // Predicated region
      $region9: #{linear_head.1} parent=5 // pred_check
        _
      $region10: #{linear_head.1} parent=5 // pred_check_branch
        %143 = sbr.rel (%p140) target = $region12
      $region11: #{linear_head.1} parent=5 // pred_region
        %s144 = ssub.s32 %s12, 1
        // Predicated region
        $region13: #{linear_head.1} parent=11 // pred_check
          %p145 = pneg %p50
        $region14: #{linear_head.1} parent=11 // pred_check_branch
          %147 = sbr.rel (%p145) target = $region16
        $region15: #{linear_head.1} parent=11 // pred_region
          %p148 = scmp.lt.s32.totalorder %s21, 0
          %s149 = scalar_select %p148, %s21, 0
          %s150 = smul.addr %s149, 8
          %s151 = scalar_lea.vmem %s0, %s150
        $region16: #{linear_head.1} parent=11 // pred_fallthru
          _
      $region12: #{linear_head.1} parent=5 // pred_fallthru
        _
      %p152 = scmp.lt.s32.totalorder %s12, 4
      // Predicated region
      $region17: #{linear_head.1} parent=5 // pred_check
        %p153 = pneg %p152
      $region18: #{linear_head.1} parent=5 // pred_check_branch
        %155 = sbr.rel (%p153) target = $region20
      $region19: #{linear_head.1} parent=5 // pred_region
        // Predicated region
        $region21: #{linear_head.1} parent=19 // pred_check
          %p156 = pneg %p70
        $region22: #{linear_head.1} parent=19 // pred_check_branch
          %158 = sbr.rel (%p156) target = $region24
        $region23: #{linear_head.1} parent=19 // pred_region
          %s159 = smul.u32 32, %s20
          %p160 = scmp.lt.s32.totalorder %s159, 127
          %s161 = scalar_select %p160, %s159, 127
          %s162 = smul.addr %s161, 8
          %s163 = scalar_lea.vmem %s1, %s162
          %s164 = smul.u32 32, %s20
        $region24: #{linear_head.1} parent=19 // pred_fallthru
          _
        // Predicated region
        $region25: #{linear_head.1} parent=19 // pred_check
          %p165 = pneg %p96
        $region26: #{linear_head.1} parent=19 // pred_check_branch
          %167 = sbr.rel (%p165) target = $region28
        $region27: #{linear_head.1} parent=19 // pred_region
          %s168 = smul.u32 2, %s20
          %p169 = scmp.lt.s32.totalorder %s168, 7
          %s170 = scalar_select %p169, %s168, 7
          %s171 = scalar_lea.vmem %s2, %s170
          %s172 = smul.u32 2, %s20
        $region28: #{linear_head.1} parent=19 // pred_fallthru
          _
      $region20: #{linear_head.1} parent=5 // pred_fallthru
        _
      %p173 = scmp.le.s32.totalorder 1, %s12
      %p174 = scmp.lt.s32.totalorder %s12, 5
      %p175 = pnand %p173, %p174
      %p176 = pneg %p175
      // Predicated region
      $region29: #{linear_head.1} parent=5 // pred_check
        _
      $region30: #{linear_head.1} parent=5 // pred_check_branch
        %178 = sbr.rel (%p175) target = $region32
      $region31: #{linear_head.1} parent=5 // pred_region
        %s179 = ssub.s32 %s12, 1
        %p180 = scmp.lt.s32.totalorder %s21, 0
        %s181 = scalar_select %p180, %s21, 0
        %s182 = smul.addr %s181, 8
        %s183 = scalar_lea.vmem %s0, %s182
        %p184 = pneg %p50
        %p185 = pneg %p47
        %s186 = smul.u32 32, %s22
        %p187 = scmp.lt.s32.totalorder %s186, 127
        %s188 = scalar_select %p187, %s186, 127
        %s189 = smul.addr %s188, 8
        %s190 = scalar_lea.vmem %s1, %s189
        %p191 = pneg %p76
        %p192 = pneg %p73
        %s193 = smul.u32 2, %s22
        %p194 = scmp.lt.s32.totalorder %s193, 7
        %s195 = scalar_select %p194, %s193, 7
        %s196 = scalar_lea.vmem %s2, %s195
        %p197 = pneg %p102
        %p198 = pneg %p99
        %p199 = pneg %p130
        %p200 = pneg %p127
        %s201 = sand.u32 %s117, 1
        %s202 = scalar_lea.sflag [#allocation3], %s201
        %s203 = sand.u32 %s117, 1
        %s204 = smul.addr %s203, 16
        %s205 = scalar_lea.vmem [#allocation2], %s204
        %p206 = scmp.lt.s32.totalorder %s21, 0
        %s207 = scalar_select %p206, %s21, 0
        %s208 = smul.addr %s207, 8
        %s209 = scalar_lea.vmem %s0, %s208
        %s210 = smul.u32 32, %s22
        %p211 = scmp.lt.s32.totalorder %s210, 127
        %s212 = scalar_select %p211, %s210, 127
        %s213 = smul.addr %s212, 8
        %s214 = scalar_lea.vmem %s1, %s213
        %s215 = smul.u32 32, %s22
        %s216 = smul.u32 2, %s22
        %p217 = scmp.lt.s32.totalorder %s216, 7
        %s218 = scalar_select %p217, %s216, 7
        %s219 = scalar_lea.vmem %s2, %s218
        %s220 = smul.u32 2, %s22
        %s221 = smul.u32 2, %s22
        %v222 = vld [vmem:[%s209] sm:$0xff]
        %v223 = vld [vmem:[%s214] sm:$0xff]
        %v224 = vld [vmem:[%s214 + $0x8] sm:$0xff]
        %v225 = vld [vmem:[%s214 + $0x10] sm:$0xff]
        %v226 = vld [vmem:[%s214 + $0x18] sm:$0xff]
        %v227 = vld [vmem:[%s214 + $0x20] sm:$0xff]
        %v228 = vld [vmem:[%s214 + $0x28] sm:$0xff]
        %v229 = vld [vmem:[%s214 + $0x30] sm:$0xff]
        %v230 = vld [vmem:[%s214 + $0x38] sm:$0xff]
        %v231 = vld [vmem:[%s214 + $0x40] sm:$0xff]
        %v232 = vld [vmem:[%s214 + $0x48] sm:$0xff]
        %v233 = vld [vmem:[%s214 + $0x50] sm:$0xff]
        %v234 = vld [vmem:[%s214 + $0x58] sm:$0xff]
        %v235 = vld [vmem:[%s214 + $0x60] sm:$0xff]
        %v236 = vld [vmem:[%s214 + $0x68] sm:$0xff]
        %v237 = vld [vmem:[%s214 + $0x70] sm:$0xff]
        %v238 = vld [vmem:[%s214 + $0x78] sm:$0xff]
        %v239 = vld [vmem:[%s214 + $0x80] sm:$0xff]
        %v240 = vld [vmem:[%s214 + $0x88] sm:$0xff]
        %v241 = vld [vmem:[%s214 + $0x90] sm:$0xff]
        %v242 = vld [vmem:[%s214 + $0x98] sm:$0xff]
        %v243 = vld [vmem:[%s214 + $0xa0] sm:$0xff]
        %v244 = vld [vmem:[%s214 + $0xa8] sm:$0xff]
        %v245 = vld [vmem:[%s214 + $0xb0] sm:$0xff]
        %v246 = vld [vmem:[%s214 + $0xb8] sm:$0xff]
        %v247 = vld [vmem:[%s214 + $0xc0] sm:$0xff]
        %v248 = vld [vmem:[%s214 + $0xc8] sm:$0xff]
        %v249 = vld [vmem:[%s214 + $0xd0] sm:$0xff]
        %v250 = vld [vmem:[%s214 + $0xd8] sm:$0xff]
        %v251 = vld [vmem:[%s214 + $0xe0] sm:$0xff]
        %v252 = vld [vmem:[%s214 + $0xe8] sm:$0xff]
        %v253 = vld [vmem:[%s214 + $0xf0] sm:$0xff]
        %v254 = vld [vmem:[%s214 + $0xf8] sm:$0xff]
        %v255 = vld [vmem:[%s219] sm:$0x3]
        %v257 = vperm.slane %v255, 0
        %v258 = vperm.slane %v255, 1
        %261 = vmatpush.xpose.msra.mxu0 %v238
        %262 = vmatpush.xpose.msra.mxu0 %v237
        %263 = vmatpush.xpose.msra.mxu0 %v236
        %264 = vmatpush.xpose.msra.mxu0 %v235
        %265 = vmatpush.xpose.msra.mxu0 %v234
        %266 = vmatpush.xpose.msra.mxu0 %v233
        %267 = vmatpush.xpose.msra.mxu0 %v232
        %268 = vmatpush.xpose.msra.mxu0 %v231
        %269 = vmatpush.xpose.msra.mxu0 %v230
        %270 = vmatpush.xpose.msra.mxu0 %v229
        %271 = vmatpush.xpose.msra.mxu0 %v228
        %272 = vmatpush.xpose.msra.mxu0 %v227
        %273 = vmatpush.xpose.msra.mxu0 %v226
        %274 = vmatpush.xpose.msra.mxu0 %v225
        %275 = vmatpush.xpose.msra.mxu0 %v224
        %276 = vmatpush.xpose.msra.mxu0 %v223
        %277 = vmatmul.f32.gmra.mxu0 %v222
        %v278 = vpop.f32.mrf.mxu0
        %v279 = vadd.f32 %v257, %v278
        %280 = vdwg.mxu0
        %281 = vmatpush.xpose.msra.mxu0 %v254
        %282 = vmatpush.xpose.msra.mxu0 %v253
        %283 = vmatpush.xpose.msra.mxu0 %v252
        %284 = vmatpush.xpose.msra.mxu0 %v251
        %285 = vmatpush.xpose.msra.mxu0 %v250
        %286 = vmatpush.xpose.msra.mxu0 %v249
        %287 = vmatpush.xpose.msra.mxu0 %v248
        %288 = vmatpush.xpose.msra.mxu0 %v247
        %289 = vmatpush.xpose.msra.mxu0 %v246
        %290 = vmatpush.xpose.msra.mxu0 %v245
        %291 = vmatpush.xpose.msra.mxu0 %v244
        %292 = vmatpush.xpose.msra.mxu0 %v243
        %293 = vmatpush.xpose.msra.mxu0 %v242
        %294 = vmatpush.xpose.msra.mxu0 %v241
        %295 = vmatpush.xpose.msra.mxu0 %v240
        %296 = vmatpush.xpose.msra.mxu0 %v239
        %297 = vmatmul.f32.gmra.mxu0 %v222
        %v298 = vpop.f32.mrf.mxu0
        %v299 = vadd.f32 %v258, %v298
        %300 = vdwg.mxu0
        %301 = vst [vmem:[%s205] sm:$0xff] %v279
        %302 = vst [vmem:[%s205 + $0x8] sm:$0xff] %v299
        %s303 = sand.u32 %s117, 1
        %s304 = scalar_lea.sflag [#allocation3], %s303
        %s305 = sand.u32 %s117, 1
        %s306 = smul.addr %s305, 16
        %s307 = scalar_lea.vmem [#allocation2], %s306
        // Predicated region
        $region33: #{linear_head.1} parent=31 // pred_check
          %p308 = pneg %p127
        $region34: #{linear_head.1} parent=31 // pred_check_branch
          %310 = sbr.rel (%p308) target = $region36
        $region35: #{linear_head.1} parent=31 // pred_region
          %s311 = smul.u32 2, %s22
          %313 = vsyncadd %s304, 0
          %s314 = smul.addr %s21, 8
          %s315 = sadd.s32 %s311, %s314
          %s316 = smul.addr %s315, 8
          %s317 = scalar_lea.hbm %s3, %s316
          %s319 = sshll.u32 %s307, 4
          %s320 = int_to_ptr.vmem [resolvable:$true] %s319
          %s321 = sshll.u32 %s317, 4
          %s322 = int_to_ptr.hbm [resolvable:$true] %s321
          %324 = dma.vmem_to_hbm [thread:$0]  %s320, 256, %s322, %s304
        $region36: #{linear_head.1} parent=31 // pred_fallthru
          _
      $region32: #{linear_head.1} parent=5 // pred_fallthru
        _
      %p325 = scmp.le.s32.totalorder 2, %s12
      // Predicated region
      $region37: #{linear_head.1} parent=5 // pred_check
        %p326 = pneg %p325
      $region38: #{linear_head.1} parent=5 // pred_check_branch
        %328 = sbr.rel (%p326) target = $region40
      $region39: #{linear_head.1} parent=5 // pred_region
        %s329 = ssub.s32 %s12, 2
        // Predicated region
        $region41: #{linear_head.1} parent=39 // pred_check
          %p330 = pneg %p133
        $region42: #{linear_head.1} parent=39 // pred_check_branch
          %332 = sbr.rel (%p330) target = $region44
        $region43: #{linear_head.1} parent=39 // pred_region
          %s333 = sand.u32 %s118, 1
          %s334 = scalar_lea.sflag [#allocation3], %s333
          %s335 = sand.u32 %s118, 1
          %s336 = smul.addr %s335, 16
          %s337 = scalar_lea.vmem [#allocation2], %s336
          %339 = dma.done %s334, 256
        $region44: #{linear_head.1} parent=39 // pred_fallthru
          _
      $region40: #{linear_head.1} parent=5 // pred_fallthru
        _
    $region6: #{linear_head.1} parent=1 // loop_footer
      %s16 = sadd.s32 1, %s12
    $region7: #{linear_head.1} parent=1 // loop_footer_branch
      %11 = sbr.rel target = $region3
    $region8: #{linear_head.1} parent=1 // loop_exit
      _
    %340 = vsyncpa [#allocation3], 1
    %s341 = scalar_lea.sflag [#allocation3], 1
    %342 = vsyncpa %s341, 1

</llo_original>
